<compile_context>
chip_gen: v5e
topology: v5e:2x2
jax: 0.10.0
libtpu: 0.0.40
codegen_flags: <defaults>
</compile_context>

<pallas_src>
import jax
import jax.numpy as jnp
from jax.experimental import pallas as pl
from jax.experimental.pallas import tpu as pltpu


def _se_kernel(x_ref, w1a_ref, w1m_ref, b1_ref,
               w2g_ref, w2b_ref, b2g_ref, b2b_ref, o_ref):
    """One (bB, C, HW) tile: global avg/max pool -> tiny MLP -> FiLM affine."""
    x = x_ref[...]                                            # (bB, C, HW), native dtype
    hw = x.shape[-1]

    # Global pools, accumulated / carried in f32.
    avg = jnp.sum(x, axis=-1, dtype=jnp.float32) * (1.0 / hw)            # (bB, C)
    mx = jnp.max(x, axis=-1).astype(jnp.float32)                         # (bB, C)

    # FC1 (2C -> Cr): weights pre-split into avg/max halves -> no in-kernel concat.
    h = (jnp.dot(avg, w1a_ref[...], preferred_element_type=jnp.float32)
         + jnp.dot(mx, w1m_ref[...], preferred_element_type=jnp.float32)
         + b1_ref[...])                                                  # (bB, Cr)
    h = h * jnp.tanh(jax.nn.softplus(h))                                 # Mish

    # FC2 (Cr -> 2C): pre-split into gamma/beta halves -> no lane-crossing slice.
    gammas = (jnp.dot(h, w2g_ref[...], preferred_element_type=jnp.float32)
              + b2g_ref[...])                                            # (bB, C)
    betas = (jnp.dot(h, w2b_ref[...], preferred_element_type=jnp.float32)
             + b2b_ref[...])                                             # (bB, C)

    # FiLM affine in f32, single downcast at the store.
    scale = jax.nn.sigmoid(gammas)[..., None]                            # (bB, C, 1) f32
    shift = betas[..., None]                                             # (bB, C, 1) f32
    o_ref[...] = (scale * x.astype(jnp.float32) + shift).astype(o_ref.dtype)


def _vmem_capacity_bytes():
    """Physical per-core VMEM, with a conservative (v7x-sized) fallback."""
    try:
        info = pltpu.get_tpu_info()
        cap = int(getattr(info, "vmem_capacity_bytes", 0))
        if cap > 0:
            return cap
    except Exception:
        pass
    return 64 * 1024 * 1024


def se_block(x, w1, b1, w2, b2):
    """x: (B, C, H, W) NCHW.  w1: (Cr, 2C), b1: (Cr,), w2: (2C, Cr), b2: (2C,)."""
    B, C, H, W = x.shape
    HW = H * W
    Cr = w1.shape[0]
    assert w1.shape == (Cr, 2 * C) and w2.shape == (2 * C, Cr)
    assert b1.shape == (Cr,) and b2.shape == (2 * C,)

    # Lane-dense spatial view (free contiguous reshape, no pad / slice passes).
    x_flat = x.reshape(B, C, HW)

    # Pre-split / pre-transposed 1x1-conv weights (f32): plain dots in-kernel.
    w1f = jnp.asarray(w1, jnp.float32)                 # (Cr, 2C)
    w2f = jnp.asarray(w2, jnp.float32)                 # (2C, Cr)
    w1a = w1f[:, :C].T                                 # (C, Cr)  acts on avg pool
    w1m = w1f[:, C:].T                                 # (C, Cr)  acts on max pool
    w2g = w2f[:C, :].T                                 # (Cr, C)  -> gammas
    w2b = w2f[C:, :].T                                 # (Cr, C)  -> betas
    b1r = jnp.asarray(b1, jnp.float32).reshape(1, Cr)
    b2g = jnp.asarray(b2, jnp.float32)[:C].reshape(1, C)
    b2b = jnp.asarray(b2, jnp.float32)[C:].reshape(1, C)

    # --- VMEM-aware batch-block sizing (generation-aware) ---
    cap = _vmem_capacity_bytes()
    budget = int(0.45 * cap)          # ~28 MiB on v7x (64 MiB), ~57 MiB on v5e/v6e
    weight_bytes = 4 * (w1a.size + w1m.size + w2g.size + w2b.size
                        + b1r.size + b2g.size + b2b.size)
    bytes_per_batch = C * HW * x.dtype.itemsize
    # Per-batch VMEM: 2 in + 2 out double-buffered blocks plus ~2 block-sized
    # f32 temps inside the kernel (f32 upcast of x and the f32 affine result).
    per_bb = 4 * bytes_per_batch + 2 * C * HW * 4
    fixed = 2 * weight_bytes + (4 << 20)

    buffered_out = None
    if fixed + per_bb > budget:
        # A single-batch block barely fits (or not): single-buffer the output
        # side to shave one block copy while keeping the one-read design.
        # TODO(synk): if even bB=1 with Buffered(1) exceeds physical VMEM
        # (very large C*H*W on v7x's 64 MiB), switch to a two-pass
        # pool-then-apply kernel tiled over HW.
        buffered_out = pl.Buffered(1)
        per_bb = 3 * bytes_per_batch + 2 * C * HW * 4

    bB = max(1, (budget - fixed) // per_bb)
    bB = min(int(bB), B)

    # Prefer ~4 grid steps (amortizes pipeline fill/drain; feeds both v7x TCs)
    # as long as blocks stay >= ~1 MiB; otherwise take the biggest block that
    # fits (single-TC v5e/v6e streaming rule).
    if B > 1:
        bb_steps = max(1, B // min(4, B))
        if bb_steps < bB and bb_steps * bytes_per_batch >= (1 << 20):
            bB = bb_steps

    grid = (pl.cdiv(B, bB),)  # partial last batch block is masked by Pallas;
                              # batch rows are independent so padded rows are inert.

    vmem_limit = fixed + per_bb * bB + (4 << 20)
    vmem_limit = int(min(max(vmem_limit, 16 << 20), cap - (2 << 20)))

    x_spec = pl.BlockSpec((bB, C, HW), lambda b: (b, 0, 0))
    if buffered_out is None:
        out_spec = pl.BlockSpec((bB, C, HW), lambda b: (b, 0, 0))
    else:
        out_spec = pl.BlockSpec((bB, C, HW), lambda b: (b, 0, 0),
                                pipeline_mode=buffered_out)

    out = pl.pallas_call(
        _se_kernel,
        out_shape=jax.ShapeDtypeStruct((B, C, HW), x.dtype),
        grid_spec=pltpu.PrefetchScalarGridSpec(
            num_scalar_prefetch=0,
            grid=grid,
            in_specs=[
                x_spec,
                pl.BlockSpec((C, Cr), lambda b: (0, 0)),
                pl.BlockSpec((C, Cr), lambda b: (0, 0)),
                pl.BlockSpec((1, Cr), lambda b: (0, 0)),
                pl.BlockSpec((Cr, C), lambda b: (0, 0)),
                pl.BlockSpec((Cr, C), lambda b: (0, 0)),
                pl.BlockSpec((1, C), lambda b: (0, 0)),
                pl.BlockSpec((1, C), lambda b: (0, 0)),
            ],
            out_specs=out_spec,
        ),
        compiler_params=pltpu.CompilerParams(
            dimension_semantics=("parallel",),
            vmem_limit_bytes=vmem_limit),
    )(x_flat, w1a, w1m, b1r, w2g, w2b, b2g, b2b)

    return out.reshape(B, C, H, W)


def se_block_ref(x, w1, b1, w2, b2):
    """Pure-JAX reference mirroring the PyTorch forward."""
    B, C, H, W = x.shape
    xf = x.astype(jnp.float32)
    avg = jnp.mean(xf, axis=(2, 3))                          # (B, C)
    mx = jnp.max(xf, axis=(2, 3))                            # (B, C)
    pooled = jnp.concatenate([avg, mx], axis=1)              # (B, 2C)
    h = pooled @ w1.T + b1
    h = h * jnp.tanh(jax.nn.softplus(h))
    o = h @ w2.T + b2
    gammas, betas = o[:, :C], o[:, C:]
    return (jax.nn.sigmoid(gammas)[:, :, None, None] * xf
            + betas[:, :, None, None]).astype(x.dtype)


if __name__ == "__main__":
    B, C, H, W = 2, 8, 16, 16
    reduction = 4
    Cr = C // reduction

    key = jax.random.PRNGKey(0)
    kx, k1, k2, k3, k4 = jax.random.split(key, 5)

    x = jax.random.normal(kx, (B, C, H, W), dtype=jnp.float32)
    # "Conv2d 1x1" parameters (weights of shape (out, in)).
    w1 = jax.random.normal(k1, (Cr, 2 * C), dtype=jnp.float32) * 0.2
    b1 = jax.random.normal(k2, (Cr,), dtype=jnp.float32) * 0.1
    w2 = jax.random.normal(k3, (2 * C, Cr), dtype=jnp.float32) * 0.2
    b2 = jax.random.normal(k4, (2 * C,), dtype=jnp.float32) * 0.1

    y = jax.block_until_ready(se_block(x, w1, b1, w2, b2))
    y_ref = se_block_ref(x, w1, b1, w2, b2)

    assert y.shape == (B, C, H, W)
    assert jnp.allclose(y, y_ref, atol=1e-5, rtol=1e-5), "mismatch vs reference"
    print("KERNEL_OK")
</pallas_src>

<mosaic_0001>
module attributes {stable_mosaic.version = 11 : i64} {
  func.func @_se_kernel(%arg0: i32, %arg1: memref<2x8x256xf32, #tpu.memory_space<vmem>>, %arg2: memref<8x2xf32, #tpu.memory_space<vmem>>, %arg3: memref<8x2xf32, #tpu.memory_space<vmem>>, %arg4: memref<1x2xf32, #tpu.memory_space<vmem>>, %arg5: memref<2x8xf32, #tpu.memory_space<vmem>>, %arg6: memref<2x8xf32, #tpu.memory_space<vmem>>, %arg7: memref<1x8xf32, #tpu.memory_space<vmem>>, %arg8: memref<1x8xf32, #tpu.memory_space<vmem>>, %arg9: memref<2x8x256xf32, #tpu.memory_space<vmem>>) attributes {dimension_semantics = [#tpu.dimension_semantics<parallel>], iteration_bounds = array<i64: 1>, scalar_prefetch = 0 : i64, scratch_operands = 0 : i64, tpu.core_type = #tpu.core_type<tc>, window_params = [{transform_indices = @transform_0, window_bounds = array<i64: 2, 8, 256>}, {pipeline_mode = #tpu.pipeline_mode<synchronous>, transform_indices = @transform_1, window_bounds = array<i64: 8, 2>}, {pipeline_mode = #tpu.pipeline_mode<synchronous>, transform_indices = @transform_2, window_bounds = array<i64: 8, 2>}, {pipeline_mode = #tpu.pipeline_mode<synchronous>, transform_indices = @transform_3, window_bounds = array<i64: 1, 2>}, {pipeline_mode = #tpu.pipeline_mode<synchronous>, transform_indices = @transform_4, window_bounds = array<i64: 2, 8>}, {pipeline_mode = #tpu.pipeline_mode<synchronous>, transform_indices = @transform_5, window_bounds = array<i64: 2, 8>}, {pipeline_mode = #tpu.pipeline_mode<synchronous>, transform_indices = @transform_6, window_bounds = array<i64: 1, 8>}, {pipeline_mode = #tpu.pipeline_mode<synchronous>, transform_indices = @transform_7, window_bounds = array<i64: 1, 8>}, {transform_indices = @transform_8, window_bounds = array<i64: 2, 8, 256>}]} {
    %c0 = arith.constant 0 : index
    %c0_0 = arith.constant 0 : index
    %c0_1 = arith.constant 0 : index
    %0 = vector.load %arg1[%c0, %c0_0, %c0_1] : memref<2x8x256xf32, #tpu.memory_space<vmem>>, vector<2x8x256xf32>
    %cst = arith.constant dense<0.000000e+00> : vector<2x8xf32>
    %1 = vector.multi_reduction <add>, %0, %cst [2] : vector<2x8x256xf32> to vector<2x8xf32>
    %cst_2 = arith.constant 3.906250e-03 : f32
    %2 = vector.broadcast %cst_2 : f32 to vector<2x8xf32>
    %3 = arith.mulf %1, %2 : vector<2x8xf32>
    %cst_3 = arith.constant dense<0xFF800000> : vector<2x8xf32>
    %4 = vector.multi_reduction <maximumf>, %0, %cst_3 [2] : vector<2x8x256xf32> to vector<2x8xf32>
    %c0_4 = arith.constant 0 : index
    %c0_5 = arith.constant 0 : index
    %5 = vector.load %arg2[%c0_4, %c0_5] : memref<8x2xf32, #tpu.memory_space<vmem>>, vector<8x2xf32>
    %cst_6 = arith.constant dense<0.000000e+00> : vector<2x2xf32>
    %6 = tpu.matmul %3, %5, %cst_6 {dimension_numbers = #tpu.dot_dimension_numbers<[1], [0], [0], [1], [0, 0, 1, 1], [], []>} : vector<2x8xf32>, vector<8x2xf32>, vector<2x2xf32> -> vector<2x2xf32>
    %c0_7 = arith.constant 0 : index
    %c0_8 = arith.constant 0 : index
    %7 = vector.load %arg3[%c0_7, %c0_8] : memref<8x2xf32, #tpu.memory_space<vmem>>, vector<8x2xf32>
    %cst_9 = arith.constant dense<0.000000e+00> : vector<2x2xf32>
    %8 = tpu.matmul %4, %7, %cst_9 {dimension_numbers = #tpu.dot_dimension_numbers<[1], [0], [0], [1], [0, 0, 1, 1], [], []>} : vector<2x8xf32>, vector<8x2xf32>, vector<2x2xf32> -> vector<2x2xf32>
    %9 = arith.addf %6, %8 : vector<2x2xf32>
    %c0_10 = arith.constant 0 : index
    %c0_11 = arith.constant 0 : index
    %10 = vector.load %arg4[%c0_10, %c0_11] : memref<1x2xf32, #tpu.memory_space<vmem>>, vector<1x2xf32>
    %11 = vector.broadcast %10 : vector<1x2xf32> to vector<2x2xf32>
    %12 = arith.addf %9, %11 : vector<2x2xf32>
    %cst_12 = arith.constant 0.000000e+00 : f32
    %13 = vector.broadcast %cst_12 : f32 to vector<2x2xf32>
    %14 = arith.maximumf %12, %13 : vector<2x2xf32>
    %15 = vector.broadcast %cst_12 : f32 to vector<2x2xf32>
    %16 = arith.subf %12, %15 : vector<2x2xf32>
    %17 = arith.cmpf one, %16, %16 : vector<2x2xf32>
    %18 = vector.broadcast %cst_12 : f32 to vector<2x2xf32>
    %19 = arith.addf %12, %18 : vector<2x2xf32>
    %20 = math.absf %16 : vector<2x2xf32>
    %cst_13 = arith.constant 0.000000e+00 : f32
    %21 = vector.broadcast %cst_13 : f32 to vector<2x2xf32>
    %22 = arith.subf %21, %20 : vector<2x2xf32>
    %23 = math.exp %22 : vector<2x2xf32>
    %24 = math.log1p %23 : vector<2x2xf32>
    %25 = arith.addf %14, %24 : vector<2x2xf32>
    %26 = arith.select %17, %19, %25 : vector<2x2xi1>, vector<2x2xf32>
    %27 = math.tanh %26 : vector<2x2xf32>
    %28 = arith.mulf %12, %27 : vector<2x2xf32>
    %c0_14 = arith.constant 0 : index
    %c0_15 = arith.constant 0 : index
    %29 = vector.load %arg5[%c0_14, %c0_15] : memref<2x8xf32, #tpu.memory_space<vmem>>, vector<2x8xf32>
    %cst_16 = arith.constant dense<0.000000e+00> : vector<2x8xf32>
    %30 = tpu.matmul %28, %29, %cst_16 {dimension_numbers = #tpu.dot_dimension_numbers<[1], [0], [0], [1], [0, 0, 1, 1], [], []>} : vector<2x2xf32>, vector<2x8xf32>, vector<2x8xf32> -> vector<2x8xf32>
    %c0_17 = arith.constant 0 : index
    %c0_18 = arith.constant 0 : index
    %31 = vector.load %arg7[%c0_17, %c0_18] : memref<1x8xf32, #tpu.memory_space<vmem>>, vector<1x8xf32>
    %32 = vector.broadcast %31 : vector<1x8xf32> to vector<2x8xf32>
    %33 = arith.addf %30, %32 : vector<2x8xf32>
    %c0_19 = arith.constant 0 : index
    %c0_20 = arith.constant 0 : index
    %34 = vector.load %arg6[%c0_19, %c0_20] : memref<2x8xf32, #tpu.memory_space<vmem>>, vector<2x8xf32>
    %cst_21 = arith.constant dense<0.000000e+00> : vector<2x8xf32>
    %35 = tpu.matmul %28, %34, %cst_21 {dimension_numbers = #tpu.dot_dimension_numbers<[1], [0], [0], [1], [0, 0, 1, 1], [], []>} : vector<2x2xf32>, vector<2x8xf32>, vector<2x8xf32> -> vector<2x8xf32>
    %c0_22 = arith.constant 0 : index
    %c0_23 = arith.constant 0 : index
    %36 = vector.load %arg8[%c0_22, %c0_23] : memref<1x8xf32, #tpu.memory_space<vmem>>, vector<1x8xf32>
    %37 = vector.broadcast %36 : vector<1x8xf32> to vector<2x8xf32>
    %38 = arith.addf %35, %37 : vector<2x8xf32>
    %39 = arith.negf %33 : vector<2x8xf32>
    %40 = math.exp %39 : vector<2x8xf32>
    %cst_24 = arith.constant 1.000000e+00 : f32
    %41 = vector.broadcast %cst_24 : f32 to vector<2x8xf32>
    %42 = arith.addf %41, %40 : vector<2x8xf32>
    %43 = arith.divf %41, %42 : vector<2x8xf32>
    %44 = vector.shape_cast %43 : vector<2x8xf32> to vector<2x8x1xf32>
    %45 = vector.shape_cast %38 : vector<2x8xf32> to vector<2x8x1xf32>
    %46 = vector.broadcast %44 : vector<2x8x1xf32> to vector<2x8x256xf32>
    %47 = arith.mulf %46, %0 : vector<2x8x256xf32>
    %48 = vector.broadcast %45 : vector<2x8x1xf32> to vector<2x8x256xf32>
    %49 = arith.addf %47, %48 : vector<2x8x256xf32>
    %c0_25 = arith.constant 0 : index
    %c0_26 = arith.constant 0 : index
    %c0_27 = arith.constant 0 : index
    %50 = vector.load %arg9[%c0_25, %c0_26, %c0_27] : memref<2x8x256xf32, #tpu.memory_space<vmem>>, vector<2x8x256xf32>
    tpu.vector_store %arg9[%c0_25, %c0_26, %c0_27], %49 {strides = array<i32>} : memref<2x8x256xf32, #tpu.memory_space<vmem>>, vector<2x8x256xf32>,
    return
  }
  func.func @transform_0(%arg0: i32) -> (i32, i32, i32) {
    %c0_i32 = arith.constant 0 : i32
    %c0_i32_0 = arith.constant 0 : i32
    %c0_i32_1 = arith.constant 0 : i32
    return %arg0, %c0_i32, %c0_i32_0 : i32, i32, i32
  }
  func.func @transform_1(%arg0: i32) -> (i32, i32) {
    %c0_i32 = arith.constant 0 : i32
    %c0_i32_0 = arith.constant 0 : i32
    %c0_i32_1 = arith.constant 0 : i32
    return %c0_i32, %c0_i32_0 : i32, i32
  }
  func.func @transform_2(%arg0: i32) -> (i32, i32) {
    %c0_i32 = arith.constant 0 : i32
    %c0_i32_0 = arith.constant 0 : i32
    %c0_i32_1 = arith.constant 0 : i32
    return %c0_i32, %c0_i32_0 : i32, i32
  }
  func.func @transform_3(%arg0: i32) -> (i32, i32) {
    %c0_i32 = arith.constant 0 : i32
    %c0_i32_0 = arith.constant 0 : i32
    %c0_i32_1 = arith.constant 0 : i32
    return %c0_i32, %c0_i32_0 : i32, i32
  }
  func.func @transform_4(%arg0: i32) -> (i32, i32) {
    %c0_i32 = arith.constant 0 : i32
    %c0_i32_0 = arith.constant 0 : i32
    %c0_i32_1 = arith.constant 0 : i32
    return %c0_i32, %c0_i32_0 : i32, i32
  }
  func.func @transform_5(%arg0: i32) -> (i32, i32) {
    %c0_i32 = arith.constant 0 : i32
    %c0_i32_0 = arith.constant 0 : i32
    %c0_i32_1 = arith.constant 0 : i32
    return %c0_i32, %c0_i32_0 : i32, i32
  }
  func.func @transform_6(%arg0: i32) -> (i32, i32) {
    %c0_i32 = arith.constant 0 : i32
    %c0_i32_0 = arith.constant 0 : i32
    %c0_i32_1 = arith.constant 0 : i32
    return %c0_i32, %c0_i32_0 : i32, i32
  }
  func.func @transform_7(%arg0: i32) -> (i32, i32) {
    %c0_i32 = arith.constant 0 : i32
    %c0_i32_0 = arith.constant 0 : i32
    %c0_i32_1 = arith.constant 0 : i32
    return %c0_i32, %c0_i32_0 : i32, i32
  }
  func.func @transform_8(%arg0: i32) -> (i32, i32, i32) {
    %c0_i32 = arith.constant 0 : i32
    %c0_i32_0 = arith.constant 0 : i32
    %c0_i32_1 = arith.constant 0 : i32
    return %arg0, %c0_i32, %c0_i32_0 : i32, i32, i32
  }
}

</mosaic_0001>

<llo_original>
// kernel: tpu_custom_call.1
$region0: #{tpu_custom_call.1}
  #allocation0 [shape = 'u32[]', space=smem, size = 0x4, offset = 0x4, fixed_abs, tag = 'smem constant byte address 0x4 - core index']
  #allocation1 [shape = 'u32[72,128]{1,0:T(1,128)}', space=vmem, size = 0x9000, scoped, tag = 'internal scratch']
  %s0 = inlined_call_operand.hbm [shape: f32[2,8,256], index: 0, kind: input, shape index: {}]
  %s1 = inlined_call_operand.vmem [shape: f32[8,2], index: 1, kind: input, shape index: {}]
  %s2 = inlined_call_operand.vmem [shape: f32[8,2], index: 2, kind: input, shape index: {}]
  %s3 = inlined_call_operand.vmem [shape: f32[1,2], index: 3, kind: input, shape index: {}]
  %s4 = inlined_call_operand.vmem [shape: f32[2,8], index: 4, kind: input, shape index: {}]
  %s5 = inlined_call_operand.vmem [shape: f32[2,8], index: 5, kind: input, shape index: {}]
  %s6 = inlined_call_operand.vmem [shape: f32[1,8], index: 6, kind: input, shape index: {}]
  %s7 = inlined_call_operand.vmem [shape: f32[1,8], index: 7, kind: input, shape index: {}]
  %s8 = inlined_call_operand.hbm [shape: f32[2,8,256], index: 8, kind: output, shape index: {}]
  %s9 = sld [smem:[#allocation0]]
  $region46: #{tpu_custom_call.1} parent=0
    _
  %s11 = ssub.s32 1, %s9
  %s12 = scalar_select 0, %s11, %s9
  $region1: #{tpu_custom_call.1} parent=0
    #allocation2 [shape = 'u8[16384]{0}', space=vmem, size = 0x4000, scoped, tag = 'input window, operand 0, single buffered']
    #allocation3 [shape = 's32[1]{0}', space=sflag, size = 0x4, scoped, tag = 'scoped memory for tpu_custom_call.1']
    #allocation4 [shape = 's32[1]{0}', space=sflag, size = 0x4, scoped, tag = 'scoped memory for tpu_custom_call.1']
    #allocation5 [shape = 'u8[16384]{0}', space=vmem, size = 0x4000, scoped, tag = 'output window, operand 0, single buffered']
    %13 = vsyncpa [#allocation3], 0
    %14 = vsyncpa [#allocation4], 0
    // Predicated region
    $region2: #{tpu_custom_call.1} parent=1 // pred_check
      _
    $region3: #{tpu_custom_call.1} parent=1 // pred_check_branch
      %16 = sbr.rel (0) target = $region5
    $region4: #{tpu_custom_call.1} parent=1 // pred_region
      %18 = vsyncadd [#allocation3], 0
      %s19 = sshll.u32 %s0, 4
      %s20 = int_to_ptr.hbm [resolvable:$true] %s19
      %s21 = sshll.u32 [#allocation2], 4
      %s22 = int_to_ptr.vmem [resolvable:$true] %s21
      %27 = dma.hbm_to_vmem [thread:$0]  %s20, 512, %s22, [#allocation3], 256, 256, 16
    $region5: #{tpu_custom_call.1} parent=1 // pred_fallthru
      _
    // Predicated region
    $region6: #{tpu_custom_call.1} parent=1 // pred_check
      _
    $region7: #{tpu_custom_call.1} parent=1 // pred_check_branch
      %29 = sbr.rel (0) target = $region9
    $region8: #{tpu_custom_call.1} parent=1 // pred_region
      _
    $region9: #{tpu_custom_call.1} parent=1 // pred_fallthru
      _
    // Predicated region
    $region10: #{tpu_custom_call.1} parent=1 // pred_check
      _
    $region11: #{tpu_custom_call.1} parent=1 // pred_check_branch
      %31 = sbr.rel (0) target = $region13
    $region12: #{tpu_custom_call.1} parent=1 // pred_region
      _
    $region13: #{tpu_custom_call.1} parent=1 // pred_fallthru
      _
    // Predicated region
    $region14: #{tpu_custom_call.1} parent=1 // pred_check
      _
    $region15: #{tpu_custom_call.1} parent=1 // pred_check_branch
      %33 = sbr.rel (0) target = $region17
    $region16: #{tpu_custom_call.1} parent=1 // pred_region
      _
    $region17: #{tpu_custom_call.1} parent=1 // pred_fallthru
      _
    // Predicated region
    $region18: #{tpu_custom_call.1} parent=1 // pred_check
      _
    $region19: #{tpu_custom_call.1} parent=1 // pred_check_branch
      %35 = sbr.rel (0) target = $region21
    $region20: #{tpu_custom_call.1} parent=1 // pred_region
      _
    $region21: #{tpu_custom_call.1} parent=1 // pred_fallthru
      _
    // Predicated region
    $region22: #{tpu_custom_call.1} parent=1 // pred_check
      _
    $region23: #{tpu_custom_call.1} parent=1 // pred_check_branch
      %37 = sbr.rel (0) target = $region25
    $region24: #{tpu_custom_call.1} parent=1 // pred_region
      _
    $region25: #{tpu_custom_call.1} parent=1 // pred_fallthru
      _
    // Predicated region
    $region26: #{tpu_custom_call.1} parent=1 // pred_check
      _
    $region27: #{tpu_custom_call.1} parent=1 // pred_check_branch
      %39 = sbr.rel (0) target = $region29
    $region28: #{tpu_custom_call.1} parent=1 // pred_region
      _
    $region29: #{tpu_custom_call.1} parent=1 // pred_fallthru
      _
    // Predicated region
    $region30: #{tpu_custom_call.1} parent=1 // pred_check
      _
    $region31: #{tpu_custom_call.1} parent=1 // pred_check_branch
      %41 = sbr.rel (0) target = $region33
    $region32: #{tpu_custom_call.1} parent=1 // pred_region
      _
    $region33: #{tpu_custom_call.1} parent=1 // pred_fallthru
      _
    // Predicated region
    $region34: #{tpu_custom_call.1} parent=1 // pred_check
      _
    $region35: #{tpu_custom_call.1} parent=1 // pred_check_branch
      %43 = sbr.rel (0) target = $region37
    $region36: #{tpu_custom_call.1} parent=1 // pred_region
      %45 = dma.done [#allocation3], 512
    $region37: #{tpu_custom_call.1} parent=1 // pred_fallthru
      _
    %v46 = vld [vmem:[#allocation2] sm:$0xff]
    %v47 = vld [vmem:[#allocation2 + $0x8] sm:$0xff]
    %v48 = vld [vmem:[#allocation2 + $0x10] sm:$0xff]
    %v49 = vld [vmem:[#allocation2 + $0x18] sm:$0xff]
    %v50 = vadd.f32 %v46, %v47
    %51 = vadd.xlane.f32.xlu0 %v50
    %v52 = vpop.xlane.xlu0 %51
    %v53 = vadd.f32 %v48, %v49
    %54 = vadd.xlane.f32.xlu0 %v53
    %v55 = vpop.xlane.xlu0 %54
    %v56 = vmul.f32 %v52, 0.00390625
    %v57 = vmul.f32 %v55, 0.00390625
    %v58 = vmax.f32 %v46, %v47
    %59 = vmax.xlane.f32.xlu0 %v58
    %v60 = vpop.xlane.xlu0 %59
    %v61 = vmax.f32 %v48, %v49
    %62 = vmax.xlane.f32.xlu0 %v61
    %v63 = vpop.xlane.xlu0 %62
    %v64 = vld [vmem:[%s1] sm:$0xff]
    %v65 = vld [vmem:[%s2] sm:$0xff]
    %v68 = vlaneseq
    %v69 = vand.u32 %v68, 127
    %v70 = vperm.slane %v60, %v69
    %v71 = vperm.slane %v63, %v69
    %vm72 = vcmask 1041409
    %v73 = vsel %vm72, %v71, %v70
    %vm74 = vcmask 64512
    %v75 = vsel %vm74, %v73, 0
    %77 = vmatpush.msra.mxu0 0.0
    %78 = vmatpush.msra.mxu0 0.0
    %79 = vmatpush.msra.mxu0 0.0
    %80 = vmatpush.msra.mxu0 0.0
    %81 = vmatpush.msra.mxu0 0.0
    %82 = vmatpush.msra.mxu0 0.0
    %83 = vmatpush.msra.mxu0 0.0
    %84 = vmatpush.msra.mxu0 0.0
    %85 = vmatpush.msra.mxu0 0.0
    %86 = vmatpush.msra.mxu0 0.0
    %87 = vmatpush.msra.mxu0 0.0
    %88 = vmatpush.msra.mxu0 0.0
    %89 = vmatpush.msra.mxu0 0.0
    %90 = vmatpush.msra.mxu0 0.0
    %91 = vmatpush.msra.mxu0 0.0
    %92 = vmatpush.msra.mxu0 %v65
    %93 = vmatmul.f32.gmra.mxu0 %v75
    %v94 = vpop.f32.mrf.mxu0
    %v95 = vadd.f32 0.0, %v94
    %96 = vdwg.mxu0
    %v99 = vperm.slane %v56, %v69
    %v100 = vperm.slane %v57, %v69
    %v101 = vsel %vm72, %v100, %v99
    %v102 = vsel %vm74, %v101, 0
    %104 = vmatpush.msra.mxu0 0.0
    %105 = vmatpush.msra.mxu0 0.0
    %106 = vmatpush.msra.mxu0 0.0
    %107 = vmatpush.msra.mxu0 0.0
    %108 = vmatpush.msra.mxu0 0.0
    %109 = vmatpush.msra.mxu0 0.0
    %110 = vmatpush.msra.mxu0 0.0
    %111 = vmatpush.msra.mxu0 0.0
    %112 = vmatpush.msra.mxu0 0.0
    %113 = vmatpush.msra.mxu0 0.0
    %114 = vmatpush.msra.mxu0 0.0
    %115 = vmatpush.msra.mxu0 0.0
    %116 = vmatpush.msra.mxu0 0.0
    %117 = vmatpush.msra.mxu0 0.0
    %118 = vmatpush.msra.mxu0 0.0
    %119 = vmatpush.msra.mxu0 %v64
    %120 = vmatmul.f32.gmra.mxu0 %v102
    %v121 = vpop.f32.mrf.mxu0
    %v122 = vadd.f32 %v95, %v121
    %123 = vdwg.mxu0
    %v124 = vld [vmem:[%s3] sm:$0x1]
    %v126 = vperm.slane %v124, 0
    %v128 = vadd.f32 %v122, %v126
    %v129 = vmax.f32 %v128, 0.0
    %vm130 = vcmp.ne.f32.partialorder %v128, %v128
    %v131 = vadd.f32 %v128, 0.0
    %v132 = vand.u32 2147483647, %v128
    %v133 = vsub.f32 0.0, %v132
    %v134 = vmul.f32 %v133, 1.442695
    %v135 = vpow.pop %v134
    %v136 = vadd.f32 %v135, 1.0
    %v137 = vlog2.pop %v136
    %v138 = vmul.f32 %v137, 0.6931472
    %v139 = vmul.f32 -0.5, %v135
    %v140 = vadd.f32 %v139, 1.0
    %v141 = vmul.f32 %v140, %v135
    %v142 = vand.u32 2147483647, %v135
    %vm143 = vcmp.lt.f32.partialorder %v142, 0.0004427343
    %v144 = vsel %vm143, %v141, %v138
    %v145 = vadd.f32 %v129, %v144
    %v146 = vsel %vm130, %v131, %v145
    %v147 = vtanh.pop %v146
    %v148 = vmul.f32 %v128, %v147
    %v149 = vld [vmem:[%s4] sm:$0x3]
    %v150 = vld [vmem:[%s6] sm:$0x1]
    %v152 = vperm.slane %v150, 0
    %vm154 = vcmask 15360
    %v156 = vsel %vm154, %v148, 0
    %vm158 = vcmask 1041408
    %v160 = vsel %vm158, %v149, 0
    %162 = vmatpush.msra.mxu0 0.0
    %163 = vmatpush.msra.mxu0 0.0
    %164 = vmatpush.msra.mxu0 0.0
    %165 = vmatpush.msra.mxu0 0.0
    %166 = vmatpush.msra.mxu0 0.0
    %167 = vmatpush.msra.mxu0 0.0
    %168 = vmatpush.msra.mxu0 0.0
    %169 = vmatpush.msra.mxu0 0.0
    %170 = vmatpush.msra.mxu0 0.0
    %171 = vmatpush.msra.mxu0 0.0
    %172 = vmatpush.msra.mxu0 0.0
    %173 = vmatpush.msra.mxu0 0.0
    %174 = vmatpush.msra.mxu0 0.0
    %175 = vmatpush.msra.mxu0 0.0
    %176 = vmatpush.msra.mxu0 0.0
    %177 = vmatpush.msra.mxu0 %v160
    %178 = vmatmul.f32.gmra.mxu0 %v156
    %v179 = vpop.f32.mrf.mxu0
    %v180 = vadd.f32 %v152, %v179
    %181 = vdwg.mxu0
    %v182 = vld [vmem:[%s5] sm:$0x3]
    %v183 = vld [vmem:[%s7] sm:$0x1]
    %v185 = vperm.slane %v183, 0
    %v188 = vsel %vm158, %v182, 0
    %190 = vmatpush.msra.mxu0 0.0
    %191 = vmatpush.msra.mxu0 0.0
    %192 = vmatpush.msra.mxu0 0.0
    %193 = vmatpush.msra.mxu0 0.0
    %194 = vmatpush.msra.mxu0 0.0
    %195 = vmatpush.msra.mxu0 0.0
    %196 = vmatpush.msra.mxu0 0.0
    %197 = vmatpush.msra.mxu0 0.0
    %198 = vmatpush.msra.mxu0 0.0
    %199 = vmatpush.msra.mxu0 0.0
    %200 = vmatpush.msra.mxu0 0.0
    %201 = vmatpush.msra.mxu0 0.0
    %202 = vmatpush.msra.mxu0 0.0
    %203 = vmatpush.msra.mxu0 0.0
    %204 = vmatpush.msra.mxu0 0.0
    %205 = vmatpush.msra.mxu0 %v188
    %206 = vmatmul.f32.gmra.mxu0 %v156
    %v207 = vpop.f32.mrf.mxu0
    %v208 = vadd.f32 %v185, %v207
    %209 = vdwg.mxu0
    %v210 = vxor.u32 %v180, 2147483648
    %v211 = vmul.f32 %v210, 1.442695
    %v212 = vpow.pop %v211
    %v213 = vadd.f32 %v212, 1.0
    %v214 = vrcp.pop %v213
    %v215 = vmul.f32 %v213, %v214
    %v216 = vsub.f32 1.0, %v215
    %v217 = vmul.f32 %v214, %v216
    %v218 = vadd.f32 %v214, %v217
    %vm219 = vweird.f32 %v213
    %vm220 = vweird.f32 %v214
    %vm221 = vmor %vm219, %vm220
    %v222 = vsel %vm221, %v214, %v218
    %v223 = vand.u32 2147483647, %v213
    %vm224 = vcmp.eq.f32.partialorder %v223, 8.507059e+37
    %v225 = vand.u32 %v213, 2147483648
    %v226 = vor.u32 1.1754944e-38, %v225
    %v227 = vsel %vm224, %v226, %v222
    %v228 = vmul.f32 1.0, %v227
    %v229 = vperm.slane %v228, 0
    %v230 = vlaneseq
    %v231 = vshrl.u32 %v230, 7
    %233 = vset.pattern.permute.xlu0 %v231
    %234 = vperm.xlu0 %233, %v229
    %v235 = vpop.permute.xlu0 %234
    %v236 = vperm.slane %v228, 1
    %v237 = vlaneseq
    %v238 = vshrl.u32 %v237, 7
    %240 = vset.pattern.permute.xlu0 %v238
    %241 = vperm.xlu0 %240, %v236
    %v242 = vpop.permute.xlu0 %241
    %v243 = vperm.slane %v208, 0
    %v244 = vlaneseq
    %v245 = vshrl.u32 %v244, 7
    %247 = vset.pattern.permute.xlu0 %v245
    %248 = vperm.xlu0 %247, %v243
    %v249 = vpop.permute.xlu0 %248
    %v250 = vperm.slane %v208, 1
    %v251 = vlaneseq
    %v252 = vshrl.u32 %v251, 7
    %254 = vset.pattern.permute.xlu0 %v252
    %255 = vperm.xlu0 %254, %v250
    %v256 = vpop.permute.xlu0 %255
    %v257 = vmul.f32 %v235, %v46
    %v258 = vmul.f32 %v235, %v47
    %v259 = vmul.f32 %v242, %v48
    %v260 = vmul.f32 %v242, %v49
    %v261 = vadd.f32 %v257, %v249
    %v262 = vadd.f32 %v258, %v249
    %v263 = vadd.f32 %v259, %v256
    %v264 = vadd.f32 %v260, %v256
    %265 = vst [vmem:[#allocation5] sm:$0xff] %v261
    %266 = vst [vmem:[#allocation5 + $0x8] sm:$0xff] %v262
    %267 = vst [vmem:[#allocation5 + $0x10] sm:$0xff] %v263
    %268 = vst [vmem:[#allocation5 + $0x18] sm:$0xff] %v264
    // Predicated region
    $region38: #{tpu_custom_call.1} parent=1 // pred_check
      _
    $region39: #{tpu_custom_call.1} parent=1 // pred_check_branch
      %270 = sbr.rel (0) target = $region41
    $region40: #{tpu_custom_call.1} parent=1 // pred_region
      %272 = vsyncadd [#allocation4], 0
      %s273 = sshll.u32 [#allocation5], 4
      %s274 = int_to_ptr.vmem [resolvable:$true] %s273
      %s275 = sshll.u32 %s8, 4
      %s276 = int_to_ptr.hbm [resolvable:$true] %s275
      %281 = dma.vmem_to_hbm [thread:$0]  %s274, 512, %s276, [#allocation4], 256, 256, 16
    $region41: #{tpu_custom_call.1} parent=1 // pred_fallthru
      _
    // Predicated region
    $region42: #{tpu_custom_call.1} parent=1 // pred_check
      _
    $region43: #{tpu_custom_call.1} parent=1 // pred_check_branch
      %283 = sbr.rel (0) target = $region45
    $region44: #{tpu_custom_call.1} parent=1 // pred_region
      %285 = dma.done [#allocation4], 512
    $region45: #{tpu_custom_call.1} parent=1 // pred_fallthru
      _
    %286 = vsyncpa [#allocation3], 1
    %287 = vsyncpa [#allocation4], 1

</llo_original>
